<compile_context>
chip_gen: v7x
topology: tpu7x:2x2x1
jax: 0.10.0
libtpu: 0.0.40
codegen_flags: <defaults>
</compile_context>

<pallas_src>
import functools
import math

import jax
import jax.numpy as jnp
from jax.experimental import pallas as pl
from jax.experimental.pallas import tpu as pltpu

LANE = 128


def _round_up(v, m):
    return ((v + m - 1) // m) * m


def _bf16_vpu_supported():
    """bf16 through the VPU/EUP (bias add + tanh) only helps on v6e/v7x."""
    try:
        kind = jax.devices()[0].device_kind.lower()
    except Exception:
        return False
    return ('v6' in kind) or ('v7' in kind) or ('7x' in kind)


def mlp_kernel(x_ref, w0_ref, b_stk_ref, w_stk_ref, wo_ref, bo_ref, out_ref,
               *, act_dtype, chunk):
    """One batch tile of the MLP forward in the (features, batch) layout.

    x_ref:     (in_dim, TB)                    f32
    w0_ref:    (H, in_dim)                     f32 (K==1 path stays on the VPU)
    b_stk_ref: (n_hidden, H, 1)                f32
    w_stk_ref: (n_hidden-1, H, H)              bf16 or f32 (MXU operand dtype)
    wo_ref:    (H, out_dim), bo_ref: (out_dim, 1)   f32
    out_ref:   (out_dim, TB)                   f32
    """
    tb = out_ref.shape[-1]
    n_rest = w_stk_ref.shape[0]
    mxu_dtype = w_stk_ref.dtype

    def tile_chunk(start):
        xs = x_ref[:, pl.ds(start, chunk)]                       # (in_dim, chunk) f32

        # ---- hidden layer 0 ----
        if w0_ref.shape[1] == 1:
            # K == 1: outer product -> VPU broadcast multiply, skip the MXU.
            h = w0_ref[...] * xs                                 # (H,1)*(1,chunk)
        else:
            h = jnp.dot(w0_ref[...].astype(mxu_dtype), xs.astype(mxu_dtype),
                        preferred_element_type=jnp.float32)
        h = jnp.tanh((h + b_stk_ref[0]).astype(act_dtype))

        # ---- hidden layers 1..n-1: tanh(W @ h + b) on the MXU ----
        for j in range(n_rest):
            acc = jnp.dot(w_stk_ref[j], h.astype(mxu_dtype),
                          preferred_element_type=jnp.float32)
            h = jnp.tanh((acc + b_stk_ref[j + 1]).astype(act_dtype))

        # ---- output head 'f' (linear) ----
        hf = h.astype(jnp.float32)
        if wo_ref.shape[1] == 1:
            # N == 1: VPU multiply + XLU sublane reduction, skip the MXU.
            y = jnp.sum(wo_ref[...] * hf, axis=0, keepdims=True) + bo_ref[...]
        else:
            y = jnp.einsum('ho,ht->ot', wo_ref[...], hf,
                           preferred_element_type=jnp.float32) + bo_ref[...]

        out_ref[:, pl.ds(start, chunk)] = y.astype(out_ref.dtype)

    # Fully-unrolled chunk loop over the lane (batch) axis: each chunk's h is
    # only a few vregs, so the 4-layer chain stays register-resident.
    n_chunks = tb // chunk
    for c in range(n_chunks):
        tile_chunk(c * chunk)


def xavier_uniform(key, shape, dtype=jnp.float32):
    # matches torch.nn.init.xavier_uniform_ (gain=1); bound is symmetric in
    # fan_in/fan_out so the 2-D shape order does not matter.
    bound = math.sqrt(6.0 / (shape[0] + shape[1]))
    return jax.random.uniform(key, shape, dtype=dtype, minval=-bound, maxval=bound)


def init_mlp_params(key, in_dim=1, hidden=(50, 50, 50, 50), out_dim=1):
    """Parameter init mirroring the PyTorch module's __init__.

    Hidden weights: xavier_uniform, stored (out_features, in_features).
    Biases: uniform [0, 1) (torch.nn.init.uniform_), stored (out_features, 1).
    Output head weight stored (hidden, out_dim) (i.e. W_out.T).
    """
    dims = [in_dim] + list(hidden)
    params = []
    for i in range(len(hidden)):
        key, kw, kb = jax.random.split(key, 3)
        params.append(xavier_uniform(kw, (dims[i + 1], dims[i])))
        params.append(jax.random.uniform(kb, (dims[i + 1], 1), dtype=jnp.float32))
    key, kw, kb = jax.random.split(key, 3)
    params.append(xavier_uniform(kw, (hidden[-1], out_dim)))
    params.append(jax.random.uniform(kb, (out_dim, 1), dtype=jnp.float32))
    return params


def mlp_forward(inputs, params, *, batch_tile=2048, use_bf16=True, input_keys=('x',)):
    """inputs: dict with key 'x' of shape (batch, in_dim). Returns {'f': (batch, out_dim)}."""
    # concat over input_dim keys (only 'x' here) — plain-JAX glue
    x = jnp.concatenate([inputs[k] for k in input_keys], axis=-1)   # (B, in_dim)
    batch, in_dim = x.shape

    # ---- unpack & consolidate params ----
    n_hidden = (len(params) - 2) // 2
    assert n_hidden >= 2, "expected >= 2 hidden layers (default config has 4)"
    ws = [params[2 * i] for i in range(n_hidden)]
    bs = [params[2 * i + 1] for i in range(n_hidden)]
    wo, bo = params[-2], params[-1]
    hidden = ws[0].shape[0]
    assert all(w.shape == (hidden, hidden) for w in ws[1:]), \
        "uniform hidden widths required for weight stacking"
    out_dim = wo.shape[1]

    mxu_dtype = jnp.bfloat16 if use_bf16 else jnp.float32
    act_dtype = jnp.bfloat16 if (use_bf16 and _bf16_vpu_supported()) else jnp.float32

    w0 = ws[0].astype(jnp.float32)                        # K==1 layer stays on the VPU
    w_stack = jnp.stack(ws[1:], axis=0).astype(mxu_dtype)  # (n_hidden-1, H, H)
    b_stack = jnp.stack(bs, axis=0).astype(jnp.float32)    # (n_hidden, H, 1)
    wo = wo.astype(jnp.float32)
    bo = bo.astype(jnp.float32)

    # ---- tile / grid selection (batch-on-lanes) ----
    padded128 = _round_up(batch, LANE)
    tb = min(_round_up(batch_tile, LANE), padded128)
    if padded128 > LANE:
        # keep >= 2 grid steps so v7x's two TensorCores both get a share
        tb = min(tb, _round_up(padded128 // 2, LANE))
    tb = max(tb, LANE)
    padded = _round_up(batch, tb)
    grid = (padded // tb,)
    chunk = 256 if tb % 256 == 0 else LANE

    xt = x.T                                              # (in_dim, B)
    if padded != batch:
        xt = jnp.pad(xt, ((0, 0), (0, padded - batch)))

    const2 = lambda i: (0, 0)
    const3 = lambda i: (0, 0, 0)
    kernel = functools.partial(mlp_kernel, act_dtype=act_dtype, chunk=chunk)

    out_t = pl.pallas_call(
        kernel,
        out_shape=jax.ShapeDtypeStruct((out_dim, padded), jnp.float32),
        grid=grid,
        in_specs=[
            pl.BlockSpec((in_dim, tb), lambda i: (0, i)),   # x tile, batch on lanes
            pl.BlockSpec(w0.shape, const2),                 # resident params
            pl.BlockSpec(b_stack.shape, const3),
            pl.BlockSpec(w_stack.shape, const3),
            pl.BlockSpec(wo.shape, const2),
            pl.BlockSpec(bo.shape, const2),
        ],
        out_specs=pl.BlockSpec((out_dim, tb), lambda i: (0, i)),
        compiler_params=pltpu.CompilerParams(
            dimension_semantics=("parallel",),
        ),
    )(xt, w0, b_stack, w_stack, wo, bo)

    return {'f': out_t[:, :batch].T}


def mlp_reference(inputs, params, input_keys=('x',)):
    """Pure-JAX f32 reference mirroring the PyTorch module's forward."""
    x = jnp.concatenate([inputs[k] for k in input_keys], axis=-1)
    n_hidden = (len(params) - 2) // 2
    h = x
    for i in range(n_hidden):
        w = params[2 * i]          # (out, in)
        b = params[2 * i + 1]      # (out, 1)
        h = jnp.tanh(h @ w.T + b[:, 0])
    wo = params[-2]                # (hidden, out_dim)
    bo = params[-1]                # (out_dim, 1)
    return {'f': h @ wo + bo[:, 0]}


if __name__ == "__main__":
    key = jax.random.PRNGKey(0)
    kp, kx1, kx2 = jax.random.split(key, 3)

    params = init_mlp_params(kp, in_dim=1, hidden=(50, 50, 50, 50), out_dim=1)

    # small-shape check (single grid step, padded to one 128-wide tile)
    batch = 8
    x = jax.random.normal(kx1, (batch, 1), dtype=jnp.float32)
    inputs = {'x': x}
    ref = mlp_reference(inputs, params)
    ys = mlp_forward(inputs, params)                      # default bf16 MXU path
    jax.block_until_ready(ys['f'])
    assert ys['f'].shape == (batch, 1)
    assert jnp.allclose(ys['f'], ref['f'], atol=3e-2, rtol=3e-2)

    # multi-tile check (exercises the >=2-step parallel grid, padding,
    # resident stacked weights and the unrolled 256-lane chunk loop)
    batch2 = 1000
    x2 = jax.random.normal(kx2, (batch2, 1), dtype=jnp.float32)
    inputs2 = {'x': x2}
    ref2 = mlp_reference(inputs2, params)
    ys2 = mlp_forward(inputs2, params)                    # default bf16 MXU path
    jax.block_until_ready(ys2['f'])
    assert ys2['f'].shape == (batch2, 1)
    assert jnp.allclose(ys2['f'], ref2['f'], atol=3e-2, rtol=3e-2)

    # exact-f32 path preserves the PyTorch module's forward semantics tightly
    ys2f = mlp_forward(inputs2, params, use_bf16=False)
    jax.block_until_ready(ys2f['f'])
    assert jnp.allclose(ys2f['f'], ref2['f'], atol=1e-5, rtol=1e-5)

    print("KERNEL_OK")
</pallas_src>

<mosaic_0001>
module attributes {stable_mosaic.version = 11 : i64} {
  func.func @mlp_kernel(%arg0: i32, %arg1: memref<1x128xf32, #tpu.memory_space<vmem>>, %arg2: memref<50x1xf32, #tpu.memory_space<vmem>>, %arg3: memref<4x50x1xf32, #tpu.memory_space<vmem>>, %arg4: memref<3x50x50xbf16, #tpu.memory_space<vmem>>, %arg5: memref<50x1xf32, #tpu.memory_space<vmem>>, %arg6: memref<1x1xf32, #tpu.memory_space<vmem>>, %arg7: memref<1x128xf32, #tpu.memory_space<vmem>>) attributes {dimension_semantics = [#tpu.dimension_semantics<parallel>], iteration_bounds = array<i64: 1>, scalar_prefetch = 0 : i64, scratch_operands = 0 : i64, tpu.core_type = #tpu.core_type<tc>, window_params = [{transform_indices = @transform_0, window_bounds = array<i64: 1, 128>}, {pipeline_mode = #tpu.pipeline_mode<synchronous>, transform_indices = @transform_1, window_bounds = array<i64: 50, 1>}, {pipeline_mode = #tpu.pipeline_mode<synchronous>, transform_indices = @transform_2, window_bounds = array<i64: 4, 50, 1>}, {pipeline_mode = #tpu.pipeline_mode<synchronous>, transform_indices = @transform_3, window_bounds = array<i64: 3, 50, 50>}, {pipeline_mode = #tpu.pipeline_mode<synchronous>, transform_indices = @transform_4, window_bounds = array<i64: 50, 1>}, {pipeline_mode = #tpu.pipeline_mode<synchronous>, transform_indices = @transform_5, window_bounds = array<i64: 1, 1>}, {transform_indices = @transform_6, window_bounds = array<i64: 1, 128>}]} {
    %c0 = arith.constant 0 : index
    %c0_0 = arith.constant 0 : index
    %0 = vector.load %arg1[%c0, %c0_0] : memref<1x128xf32, #tpu.memory_space<vmem>>, vector<1x128xf32>
    %c0_1 = arith.constant 0 : index
    %c0_2 = arith.constant 0 : index
    %1 = vector.load %arg2[%c0_1, %c0_2] : memref<50x1xf32, #tpu.memory_space<vmem>>, vector<50x1xf32>
    %2 = vector.broadcast %1 : vector<50x1xf32> to vector<50x128xf32>
    %3 = vector.broadcast %0 : vector<1x128xf32> to vector<50x128xf32>
    %4 = arith.mulf %2, %3 : vector<50x128xf32>
    %c0_3 = arith.constant 0 : index
    %c0_4 = arith.constant 0 : index
    %c0_5 = arith.constant 0 : index
    %5 = vector.load %arg3[%c0_3, %c0_4, %c0_5] : memref<4x50x1xf32, #tpu.memory_space<vmem>>, vector<1x50x1xf32>
    %6 = vector.shape_cast %5 : vector<1x50x1xf32> to vector<50x1xf32>
    %7 = vector.broadcast %6 : vector<50x1xf32> to vector<50x128xf32>
    %8 = arith.addf %4, %7 : vector<50x128xf32>
    %9 = math.tanh %8 : vector<50x128xf32>
    %c0_6 = arith.constant 0 : index
    %c0_7 = arith.constant 0 : index
    %c0_8 = arith.constant 0 : index
    %10 = vector.load %arg4[%c0_6, %c0_7, %c0_8] : memref<3x50x50xbf16, #tpu.memory_space<vmem>>, vector<1x50x50xbf16>
    %11 = vector.shape_cast %10 : vector<1x50x50xbf16> to vector<50x50xbf16>
    %12 = arith.truncf %9 : vector<50x128xf32> to vector<50x128xbf16>
    %cst = arith.constant dense<0.000000e+00> : vector<50x128xf32>
    %13 = tpu.matmul %11, %12, %cst {dimension_numbers = #tpu.dot_dimension_numbers<[1], [0], [0], [1], [0, 0, 1, 1], [], []>} : vector<50x50xbf16>, vector<50x128xbf16>, vector<50x128xf32> -> vector<50x128xf32>
    %c1 = arith.constant 1 : index
    %c0_9 = arith.constant 0 : index
    %c0_10 = arith.constant 0 : index
    %14 = vector.load %arg3[%c1, %c0_9, %c0_10] : memref<4x50x1xf32, #tpu.memory_space<vmem>>, vector<1x50x1xf32>
    %15 = vector.shape_cast %14 : vector<1x50x1xf32> to vector<50x1xf32>
    %16 = vector.broadcast %15 : vector<50x1xf32> to vector<50x128xf32>
    %17 = arith.addf %13, %16 : vector<50x128xf32>
    %18 = math.tanh %17 : vector<50x128xf32>
    %c1_11 = arith.constant 1 : index
    %c0_12 = arith.constant 0 : index
    %c0_13 = arith.constant 0 : index
    %19 = vector.load %arg4[%c1_11, %c0_12, %c0_13] : memref<3x50x50xbf16, #tpu.memory_space<vmem>>, vector<1x50x50xbf16>
    %20 = vector.shape_cast %19 : vector<1x50x50xbf16> to vector<50x50xbf16>
    %21 = arith.truncf %18 : vector<50x128xf32> to vector<50x128xbf16>
    %cst_14 = arith.constant dense<0.000000e+00> : vector<50x128xf32>
    %22 = tpu.matmul %20, %21, %cst_14 {dimension_numbers = #tpu.dot_dimension_numbers<[1], [0], [0], [1], [0, 0, 1, 1], [], []>} : vector<50x50xbf16>, vector<50x128xbf16>, vector<50x128xf32> -> vector<50x128xf32>
    %c2 = arith.constant 2 : index
    %c0_15 = arith.constant 0 : index
    %c0_16 = arith.constant 0 : index
    %23 = vector.load %arg3[%c2, %c0_15, %c0_16] : memref<4x50x1xf32, #tpu.memory_space<vmem>>, vector<1x50x1xf32>
    %24 = vector.shape_cast %23 : vector<1x50x1xf32> to vector<50x1xf32>
    %25 = vector.broadcast %24 : vector<50x1xf32> to vector<50x128xf32>
    %26 = arith.addf %22, %25 : vector<50x128xf32>
    %27 = math.tanh %26 : vector<50x128xf32>
    %c2_17 = arith.constant 2 : index
    %c0_18 = arith.constant 0 : index
    %c0_19 = arith.constant 0 : index
    %28 = vector.load %arg4[%c2_17, %c0_18, %c0_19] : memref<3x50x50xbf16, #tpu.memory_space<vmem>>, vector<1x50x50xbf16>
    %29 = vector.shape_cast %28 : vector<1x50x50xbf16> to vector<50x50xbf16>
    %30 = arith.truncf %27 : vector<50x128xf32> to vector<50x128xbf16>
    %cst_20 = arith.constant dense<0.000000e+00> : vector<50x128xf32>
    %31 = tpu.matmul %29, %30, %cst_20 {dimension_numbers = #tpu.dot_dimension_numbers<[1], [0], [0], [1], [0, 0, 1, 1], [], []>} : vector<50x50xbf16>, vector<50x128xbf16>, vector<50x128xf32> -> vector<50x128xf32>
    %c3 = arith.constant 3 : index
    %c0_21 = arith.constant 0 : index
    %c0_22 = arith.constant 0 : index
    %32 = vector.load %arg3[%c3, %c0_21, %c0_22] : memref<4x50x1xf32, #tpu.memory_space<vmem>>, vector<1x50x1xf32>
    %33 = vector.shape_cast %32 : vector<1x50x1xf32> to vector<50x1xf32>
    %34 = vector.broadcast %33 : vector<50x1xf32> to vector<50x128xf32>
    %35 = arith.addf %31, %34 : vector<50x128xf32>
    %36 = math.tanh %35 : vector<50x128xf32>
    %c0_23 = arith.constant 0 : index
    %c0_24 = arith.constant 0 : index
    %37 = vector.load %arg5[%c0_23, %c0_24] : memref<50x1xf32, #tpu.memory_space<vmem>>, vector<50x1xf32>
    %38 = vector.broadcast %37 : vector<50x1xf32> to vector<50x128xf32>
    %39 = arith.mulf %38, %36 : vector<50x128xf32>
    %cst_25 = arith.constant dense<0.000000e+00> : vector<128xf32>
    %40 = vector.multi_reduction <add>, %39, %cst_25 [0] : vector<50x128xf32> to vector<128xf32>
    %41 = vector.shape_cast %40 : vector<128xf32> to vector<1x128xf32>
    %c0_26 = arith.constant 0 : index
    %c0_27 = arith.constant 0 : index
    %42 = vector.load %arg6[%c0_26, %c0_27] : memref<1x1xf32, #tpu.memory_space<vmem>>, vector<1x1xf32>
    %43 = vector.broadcast %42 : vector<1x1xf32> to vector<1x128xf32>
    %44 = arith.addf %41, %43 : vector<1x128xf32>
    %c0_28 = arith.constant 0 : index
    %c0_29 = arith.constant 0 : index
    %45 = vector.load %arg7[%c0_28, %c0_29] : memref<1x128xf32, #tpu.memory_space<vmem>>, vector<1x128xf32>
    tpu.vector_store %arg7[%c0_28, %c0_29], %44 {strides = array<i32>} : memref<1x128xf32, #tpu.memory_space<vmem>>, vector<1x128xf32>,
    return
  }
  func.func @transform_0(%arg0: i32) -> (i32, i32) {
    %c0_i32 = arith.constant 0 : i32
    %c0_i32_0 = arith.constant 0 : i32
    return %c0_i32, %arg0 : i32, i32
  }
  func.func @transform_1(%arg0: i32) -> (i32, i32) {
    %c0_i32 = arith.constant 0 : i32
    %c0_i32_0 = arith.constant 0 : i32
    %c0_i32_1 = arith.constant 0 : i32
    return %c0_i32, %c0_i32_0 : i32, i32
  }
  func.func @transform_2(%arg0: i32) -> (i32, i32, i32) {
    %c0_i32 = arith.constant 0 : i32
    %c0_i32_0 = arith.constant 0 : i32
    %c0_i32_1 = arith.constant 0 : i32
    %c0_i32_2 = arith.constant 0 : i32
    return %c0_i32, %c0_i32_0, %c0_i32_1 : i32, i32, i32
  }
  func.func @transform_3(%arg0: i32) -> (i32, i32, i32) {
    %c0_i32 = arith.constant 0 : i32
    %c0_i32_0 = arith.constant 0 : i32
    %c0_i32_1 = arith.constant 0 : i32
    %c0_i32_2 = arith.constant 0 : i32
    return %c0_i32, %c0_i32_0, %c0_i32_1 : i32, i32, i32
  }
  func.func @transform_4(%arg0: i32) -> (i32, i32) {
    %c0_i32 = arith.constant 0 : i32
    %c0_i32_0 = arith.constant 0 : i32
    %c0_i32_1 = arith.constant 0 : i32
    return %c0_i32, %c0_i32_0 : i32, i32
  }
  func.func @transform_5(%arg0: i32) -> (i32, i32) {
    %c0_i32 = arith.constant 0 : i32
    %c0_i32_0 = arith.constant 0 : i32
    %c0_i32_1 = arith.constant 0 : i32
    return %c0_i32, %c0_i32_0 : i32, i32
  }
  func.func @transform_6(%arg0: i32) -> (i32, i32) {
    %c0_i32 = arith.constant 0 : i32
    %c0_i32_0 = arith.constant 0 : i32
    return %c0_i32, %arg0 : i32, i32
  }
}

</mosaic_0001>

<llo_original>
// kernel: tpu_custom_call.1
$region0: #{tpu_custom_call.1}
  #allocation0 [shape = 'u32[]', space=smem, size = 0x4, offset = 0x4, fixed_abs, tag = 'smem constant byte address 0x4 - core index']
  #allocation1 [shape = 'u32[144,128]{1,0:T(1,128)}', space=vmem, size = 0x12000, scoped, tag = 'internal scratch']
  #allocation2 [shape = 'f32[1,1]{1,0:T(1,128)S(1)}', space=vmem, size = 0x200, scoped, tag = 'scoped memory for tpu_custom_call.1']
  %s0 = inlined_call_operand.vmem [shape: f32[1,128], index: 0, kind: input, shape index: {}]
  %s1 = inlined_call_operand.vmem [shape: f32[50,1], index: 1, kind: input, shape index: {}]
  %s2 = inlined_call_operand.vmem [shape: f32[4,50,1], index: 2, kind: input, shape index: {}]
  %s3 = inlined_call_operand.vmem [shape: bf16[3,50,50], index: 3, kind: input, shape index: {}]
  %s4 = inlined_call_operand.vmem [shape: f32[50,1], index: 4, kind: input, shape index: {}]
  %s5 = inlined_call_operand.<no memory space> [shape: f32[1,1], index: 5, kind: input, shape index: {}]
  %s6 = inlined_call_operand.hbm [shape: f32[1,128], index: 6, kind: output, shape index: {}]
  %s7 = sld [smem:[#allocation0]]
  $region34: #{tpu_custom_call.1} parent=0
    _
  %s9 = ssub.s32 1, %s7
  %s10 = scalar_select 0, %s9, %s7
  %v11 = vstv %s5
  %12 = vst [vmem:[#allocation2] sm:$0x1] %v11
  $region1: #{tpu_custom_call.1} parent=0
    #allocation3 [shape = 'u8[512]{0}', space=vmem, size = 0x400, scoped, tag = 'output window, operand 0, single buffered']
    #allocation4 [shape = 's32[1]{0}', space=sflag, size = 0x4, scoped, tag = 'scoped memory for tpu_custom_call.1']
    %13 = vsyncpa [#allocation4], 0
    // Predicated region
    $region2: #{tpu_custom_call.1} parent=1 // pred_check
      _
    $region3: #{tpu_custom_call.1} parent=1 // pred_check_branch
      %15 = sbr.rel (0) target = $region5
    $region4: #{tpu_custom_call.1} parent=1 // pred_region
      _
    $region5: #{tpu_custom_call.1} parent=1 // pred_fallthru
      _
    // Predicated region
    $region6: #{tpu_custom_call.1} parent=1 // pred_check
      _
    $region7: #{tpu_custom_call.1} parent=1 // pred_check_branch
      %17 = sbr.rel (0) target = $region9
    $region8: #{tpu_custom_call.1} parent=1 // pred_region
      _
    $region9: #{tpu_custom_call.1} parent=1 // pred_fallthru
      _
    // Predicated region
    $region10: #{tpu_custom_call.1} parent=1 // pred_check
      _
    $region11: #{tpu_custom_call.1} parent=1 // pred_check_branch
      %19 = sbr.rel (0) target = $region13
    $region12: #{tpu_custom_call.1} parent=1 // pred_region
      _
    $region13: #{tpu_custom_call.1} parent=1 // pred_fallthru
      _
    // Predicated region
    $region14: #{tpu_custom_call.1} parent=1 // pred_check
      _
    $region15: #{tpu_custom_call.1} parent=1 // pred_check_branch
      %21 = sbr.rel (0) target = $region17
    $region16: #{tpu_custom_call.1} parent=1 // pred_region
      _
    $region17: #{tpu_custom_call.1} parent=1 // pred_fallthru
      _
    // Predicated region
    $region18: #{tpu_custom_call.1} parent=1 // pred_check
      _
    $region19: #{tpu_custom_call.1} parent=1 // pred_check_branch
      %23 = sbr.rel (0) target = $region21
    $region20: #{tpu_custom_call.1} parent=1 // pred_region
      _
    $region21: #{tpu_custom_call.1} parent=1 // pred_fallthru
      _
    // Predicated region
    $region22: #{tpu_custom_call.1} parent=1 // pred_check
      _
    $region23: #{tpu_custom_call.1} parent=1 // pred_check_branch
      %25 = sbr.rel (0) target = $region25
    $region24: #{tpu_custom_call.1} parent=1 // pred_region
      _
    $region25: #{tpu_custom_call.1} parent=1 // pred_fallthru
      _
    %v27 = vld [vmem:[%s0] sm:$0x1]
    %v28 = vld [vmem:[%s1] sm:$0xff]
    %v29 = vld [vmem:[%s1 + $0x8] sm:$0xff]
    %v30 = vld [vmem:[%s1 + $0x10] sm:$0xff]
    %v31 = vld [vmem:[%s1 + $0x18] sm:$0xff]
    %v32 = vld [vmem:[%s1 + $0x20] sm:$0xff]
    %v33 = vld [vmem:[%s1 + $0x28] sm:$0xff]
    %v34 = vld [vmem:[%s1 + $0x30] sm:$0x3]
    %36 = vset.pattern.permute.xlu0 0
    %37 = vperm.xlu0 %36, %v28
    %v38 = vpop.permute.xlu0 %37
    %41 = vset.pattern.permute.xlu0 0
    %42 = vperm.xlu0 %41, %v29
    %v43 = vpop.permute.xlu0 %42
    %46 = vset.pattern.permute.xlu0 0
    %47 = vperm.xlu0 %46, %v30
    %v48 = vpop.permute.xlu0 %47
    %51 = vset.pattern.permute.xlu0 0
    %52 = vperm.xlu0 %51, %v31
    %v53 = vpop.permute.xlu0 %52
    %56 = vset.pattern.permute.xlu0 0
    %57 = vperm.xlu0 %56, %v32
    %v58 = vpop.permute.xlu0 %57
    %61 = vset.pattern.permute.xlu0 0
    %62 = vperm.xlu0 %61, %v33
    %v63 = vpop.permute.xlu0 %62
    %66 = vset.pattern.permute.xlu0 0
    %67 = vperm.xlu0 %66, %v34
    %v68 = vpop.permute.xlu0 %67
    %v71 = vlaneseq
    %v72 = vshrl.u32 %v71, 7
    %v73 = vsub.s32 0, %v72
    %v74 = vrot.slane %v27, %v73
    %v76 = vmul.f32 %v38, %v74
    %v77 = vmul.f32 %v43, %v74
    %v78 = vmul.f32 %v48, %v74
    %v79 = vmul.f32 %v53, %v74
    %v80 = vmul.f32 %v58, %v74
    %v81 = vmul.f32 %v63, %v74
    %v82 = vmul.f32 %v68, %v74
    %v83 = vld [vmem:[%s2] sm:$0xff]
    %v84 = vld [vmem:[%s2 + $0x8] sm:$0xff]
    %v85 = vld [vmem:[%s2 + $0x10] sm:$0xff]
    %v86 = vld [vmem:[%s2 + $0x18] sm:$0xff]
    %v87 = vld [vmem:[%s2 + $0x20] sm:$0xff]
    %v88 = vld [vmem:[%s2 + $0x28] sm:$0xff]
    %v89 = vld [vmem:[%s2 + $0x30] sm:$0x3]
    %91 = vset.pattern.permute.xlu0 0
    %92 = vperm.xlu0 %91, %v83
    %v93 = vpop.permute.xlu0 %92
    %96 = vset.pattern.permute.xlu0 0
    %97 = vperm.xlu0 %96, %v84
    %v98 = vpop.permute.xlu0 %97
    %101 = vset.pattern.permute.xlu0 0
    %102 = vperm.xlu0 %101, %v85
    %v103 = vpop.permute.xlu0 %102
    %106 = vset.pattern.permute.xlu0 0
    %107 = vperm.xlu0 %106, %v86
    %v108 = vpop.permute.xlu0 %107
    %111 = vset.pattern.permute.xlu0 0
    %112 = vperm.xlu0 %111, %v87
    %v113 = vpop.permute.xlu0 %112
    %116 = vset.pattern.permute.xlu0 0
    %117 = vperm.xlu0 %116, %v88
    %v118 = vpop.permute.xlu0 %117
    %121 = vset.pattern.permute.xlu0 0
    %122 = vperm.xlu0 %121, %v89
    %v123 = vpop.permute.xlu0 %122
    %v125 = vadd.f32 %v76, %v93
    %v126 = vadd.f32 %v77, %v98
    %v127 = vadd.f32 %v78, %v103
    %v128 = vadd.f32 %v79, %v108
    %v129 = vadd.f32 %v80, %v113
    %v130 = vadd.f32 %v81, %v118
    %v131 = vadd.f32 %v82, %v123
    %v132 = vtanh.pop %v125
    %v133 = vtanh.pop %v126
    %v134 = vtanh.pop %v127
    %v135 = vtanh.pop %v128
    %v136 = vtanh.pop %v129
    %v137 = vtanh.pop %v130
    %v138 = vtanh.pop %v131
    %v139 = vld [vmem:[%s3] sm:$0xf]
    %v140 = vld [vmem:[%s3 + $0x4] sm:$0xf]
    %v141 = vld [vmem:[%s3 + $0x8] sm:$0xf]
    %v142 = vld [vmem:[%s3 + $0xc] sm:$0xf]
    %v143 = vld [vmem:[%s3 + $0x10] sm:$0xf]
    %v144 = vld [vmem:[%s3 + $0x14] sm:$0xf]
    %v145 = vld [vmem:[%s3 + $0x18] sm:$0x1]
    %v146 = vpack.c.bf16 %v133, %v132
    %v147 = vpack.c.bf16 %v135, %v134
    %v148 = vpack.c.bf16 %v137, %v136
    %v149 = vpack.c.bf16 %v138, %v138
    %s150 = scalar_lea.vmem %s2, 56
    %v151 = vld [vmem:[%s150] sm:$0xff]
    %v152 = vld [vmem:[%s150 + $0x8] sm:$0xff]
    %v153 = vld [vmem:[%s150 + $0x10] sm:$0xff]
    %v154 = vld [vmem:[%s150 + $0x18] sm:$0xff]
    %v155 = vld [vmem:[%s150 + $0x20] sm:$0xff]
    %v156 = vld [vmem:[%s150 + $0x28] sm:$0xff]
    %v157 = vld [vmem:[%s150 + $0x30] sm:$0x3]
    %159 = vset.pattern.permute.xlu0 0
    %160 = vperm.xlu0 %159, %v151
    %v161 = vpop.permute.xlu0 %160
    %164 = vset.pattern.permute.xlu0 0
    %165 = vperm.xlu0 %164, %v152
    %v166 = vpop.permute.xlu0 %165
    %169 = vset.pattern.permute.xlu0 0
    %170 = vperm.xlu0 %169, %v153
    %v171 = vpop.permute.xlu0 %170
    %174 = vset.pattern.permute.xlu0 0
    %175 = vperm.xlu0 %174, %v154
    %v176 = vpop.permute.xlu0 %175
    %179 = vset.pattern.permute.xlu0 0
    %180 = vperm.xlu0 %179, %v155
    %v181 = vpop.permute.xlu0 %180
    %184 = vset.pattern.permute.xlu0 0
    %185 = vperm.xlu0 %184, %v156
    %v186 = vpop.permute.xlu0 %185
    %189 = vset.pattern.permute.xlu0 0
    %190 = vperm.xlu0 %189, %v157
    %v191 = vpop.permute.xlu0 %190
    %v200 = vunpack.c.l.b16 %v139
    %v201 = vunpack.c.l.b16 %v140
    %v202 = vunpack.c.l.b16 %v141
    %v203 = vunpack.c.l.b16 %v142
    %v204 = vunpack.c.l.b16 %v143
    %v205 = vunpack.c.l.b16 %v144
    %v206 = vunpack.c.l.b16 %v145
    %v207 = vpack.c.b16 %v201, %v200
    %v208 = vpack.c.b16 %v203, %v202
    %v209 = vpack.c.b16 %v205, %v204
    %v210 = vpack.c.b16 %v206, %v206
    %vm211 = vcmask 408576
    %v213 = vsel %vm211, %v207, 0
    %v216 = vsel %vm211, %v208, 0
    %v219 = vsel %vm211, %v209, 0
    %v222 = vsel %vm211, %v210, 0
    %vm224 = vcmask 1040384
    %v226 = vsel %vm224, %v149, 0
    %228 = vmatprep.subr.bf16.mxu0 0
    %229 = vmatpush1.bf16.msra.mxu0 %v146
    %230 = vmatprep.subr.bf16.mxu0 0
    %231 = vmatpush1.bf16.msra.mxu0 %v147
    %232 = vmatprep.subr.bf16.mxu0 0
    %233 = vmatpush1.bf16.msra.mxu0 %v148
    %234 = vmatprep.subr.bf16.mxu0 0
    %235 = vmatpush1.bf16.msra.mxu0 %v226
    %236 = vmatprep.subr.bf16.mxu0 0
    %237 = vmatpush1.bf16.msra.mxu0 0
    %238 = vmatprep.subr.bf16.mxu0 0
    %239 = vmatpush1.bf16.msra.mxu0 0
    %240 = vmatprep.subr.bf16.mxu0 0
    %241 = vmatpush1.bf16.msra.mxu0 0
    %242 = vmatprep.subr.bf16.mxu0 0
    %243 = vmatpush1.bf16.msra.mxu0 0
    %244 = vmatprep.subr.bf16.mxu0 0
    %245 = vmatpush1.bf16.msra.mxu0 0
    %246 = vmatprep.subr.bf16.mxu0 0
    %247 = vmatpush1.bf16.msra.mxu0 0
    %248 = vmatprep.subr.bf16.mxu0 0
    %249 = vmatpush1.bf16.msra.mxu0 0
    %250 = vmatprep.subr.bf16.mxu0 0
    %251 = vmatpush1.bf16.msra.mxu0 0
    %252 = vmatprep.subr.bf16.mxu0 0
    %253 = vmatpush1.bf16.msra.mxu0 0
    %254 = vmatprep.subr.bf16.mxu0 0
    %255 = vmatpush1.bf16.msra.mxu0 0
    %256 = vmatprep.subr.bf16.mxu0 0
    %257 = vmatpush1.bf16.msra.mxu0 0
    %258 = vmatprep.subr.bf16.mxu0 0
    %259 = vmatpush1.bf16.msra.mxu0 0
    %260 = vmatprep.mubr.bf16.mxu0 0
    %261 = vmatmul.mubr.bf16.gmra.mrb[0].mxu0 %v213
    %v262 = vpop.f32.mrb[0].mxu0
    %v263 = vadd.f32 %v161, %v262
    %v264 = vpop.f32.mrb[0].mxu0
    %v265 = vpop.f32.mrb[0].mxu0
    %v266 = vadd.f32 %v166, %v265
    %v267 = vpop.f32.mrb[0].mxu0
    %268 = vmatprep.mubr.bf16.mxu0 0
    %269 = vmatmul.mubr.bf16.gmra.mrb[0].mxu0 %v216
    %v270 = vpop.f32.mrb[0].mxu0
    %v271 = vadd.f32 %v171, %v270
    %v272 = vpop.f32.mrb[0].mxu0
    %v273 = vpop.f32.mrb[0].mxu0
    %v274 = vadd.f32 %v176, %v273
    %v275 = vpop.f32.mrb[0].mxu0
    %276 = vmatprep.mubr.bf16.mxu0 0
    %277 = vmatmul.mubr.bf16.gmra.mrb[0].mxu0 %v219
    %v278 = vpop.f32.mrb[0].mxu0
    %v279 = vadd.f32 %v181, %v278
    %v280 = vpop.f32.mrb[0].mxu0
    %v281 = vpop.f32.mrb[0].mxu0
    %v282 = vadd.f32 %v186, %v281
    %v283 = vpop.f32.mrb[0].mxu0
    %284 = vmatprep.mubr.bf16.mxu0 0
    %285 = vmatmul.mubr.bf16.gmra.mrb[0].mxu0 %v222
    %v286 = vpop.f32.mrb[0].mxu0
    %v287 = vadd.f32 %v191, %v286
    %v288 = vpop.f32.mrb[0].mxu0
    %v289 = vpop.f32.mrb[0].mxu0
    %v290 = vpop.f32.mrb[0].mxu0
    %291 = vdwg.mxu0
    %v292 = vtanh.pop %v263
    %v293 = vtanh.pop %v266
    %v294 = vtanh.pop %v271
    %v295 = vtanh.pop %v274
    %v296 = vtanh.pop %v279
    %v297 = vtanh.pop %v282
    %v298 = vtanh.pop %v287
    %s299 = scalar_lea.vmem %s3, 28
    %v300 = vld [vmem:[%s299] sm:$0xf]
    %v301 = vld [vmem:[%s299 + $0x4] sm:$0xf]
    %v302 = vld [vmem:[%s299 + $0x8] sm:$0xf]
    %v303 = vld [vmem:[%s299 + $0xc] sm:$0xf]
    %v304 = vld [vmem:[%s299 + $0x10] sm:$0xf]
    %v305 = vld [vmem:[%s299 + $0x14] sm:$0xf]
    %v306 = vld [vmem:[%s299 + $0x18] sm:$0x1]
    %v307 = vpack.c.bf16 %v293, %v292
    %v308 = vpack.c.bf16 %v295, %v294
    %v309 = vpack.c.bf16 %v297, %v296
    %v310 = vpack.c.bf16 %v298, %v298
    %s311 = scalar_lea.vmem %s2, 112
    %v312 = vld [vmem:[%s311] sm:$0xff]
    %v313 = vld [vmem:[%s311 + $0x8] sm:$0xff]
    %v314 = vld [vmem:[%s311 + $0x10] sm:$0xff]
    %v315 = vld [vmem:[%s311 + $0x18] sm:$0xff]
    %v316 = vld [vmem:[%s311 + $0x20] sm:$0xff]
    %v317 = vld [vmem:[%s311 + $0x28] sm:$0xff]
    %v318 = vld [vmem:[%s311 + $0x30] sm:$0x3]
    %320 = vset.pattern.permute.xlu0 0
    %321 = vperm.xlu0 %320, %v312
    %v322 = vpop.permute.xlu0 %321
    %325 = vset.pattern.permute.xlu0 0
    %326 = vperm.xlu0 %325, %v313
    %v327 = vpop.permute.xlu0 %326
    %330 = vset.pattern.permute.xlu0 0
    %331 = vperm.xlu0 %330, %v314
    %v332 = vpop.permute.xlu0 %331
    %335 = vset.pattern.permute.xlu0 0
    %336 = vperm.xlu0 %335, %v315
    %v337 = vpop.permute.xlu0 %336
    %340 = vset.pattern.permute.xlu0 0
    %341 = vperm.xlu0 %340, %v316
    %v342 = vpop.permute.xlu0 %341
    %345 = vset.pattern.permute.xlu0 0
    %346 = vperm.xlu0 %345, %v317
    %v347 = vpop.permute.xlu0 %346
    %350 = vset.pattern.permute.xlu0 0
    %351 = vperm.xlu0 %350, %v318
    %v352 = vpop.permute.xlu0 %351
    %v361 = vunpack.c.l.b16 %v300
    %v362 = vunpack.c.l.b16 %v301
    %v363 = vunpack.c.l.b16 %v302
    %v364 = vunpack.c.l.b16 %v303
    %v365 = vunpack.c.l.b16 %v304
    %v366 = vunpack.c.l.b16 %v305
    %v367 = vunpack.c.l.b16 %v306
    %v368 = vpack.c.b16 %v362, %v361
    %v369 = vpack.c.b16 %v364, %v363
    %v370 = vpack.c.b16 %v366, %v365
    %v371 = vpack.c.b16 %v367, %v367
    %v373 = vsel %vm211, %v368, 0
    %v376 = vsel %vm211, %v369, 0
    %v379 = vsel %vm211, %v370, 0
    %v382 = vsel %vm211, %v371, 0
    %v385 = vsel %vm224, %v310, 0
    %387 = vmatprep.subr.bf16.mxu0 0
    %388 = vmatpush1.bf16.msra.mxu0 %v307
    %389 = vmatprep.subr.bf16.mxu0 0
    %390 = vmatpush1.bf16.msra.mxu0 %v308
    %391 = vmatprep.subr.bf16.mxu0 0
    %392 = vmatpush1.bf16.msra.mxu0 %v309
    %393 = vmatprep.subr.bf16.mxu0 0
    %394 = vmatpush1.bf16.msra.mxu0 %v385
    %395 = vmatprep.subr.bf16.mxu0 0
    %396 = vmatpush1.bf16.msra.mxu0 0
    %397 = vmatprep.subr.bf16.mxu0 0
    %398 = vmatpush1.bf16.msra.mxu0 0
    %399 = vmatprep.subr.bf16.mxu0 0
    %400 = vmatpush1.bf16.msra.mxu0 0
    %401 = vmatprep.subr.bf16.mxu0 0
    %402 = vmatpush1.bf16.msra.mxu0 0
    %403 = vmatprep.subr.bf16.mxu0 0
    %404 = vmatpush1.bf16.msra.mxu0 0
    %405 = vmatprep.subr.bf16.mxu0 0
    %406 = vmatpush1.bf16.msra.mxu0 0
    %407 = vmatprep.subr.bf16.mxu0 0
    %408 = vmatpush1.bf16.msra.mxu0 0
    %409 = vmatprep.subr.bf16.mxu0 0
    %410 = vmatpush1.bf16.msra.mxu0 0
    %411 = vmatprep.subr.bf16.mxu0 0
    %412 = vmatpush1.bf16.msra.mxu0 0
    %413 = vmatprep.subr.bf16.mxu0 0
    %414 = vmatpush1.bf16.msra.mxu0 0
    %415 = vmatprep.subr.bf16.mxu0 0
    %416 = vmatpush1.bf16.msra.mxu0 0
    %417 = vmatprep.subr.bf16.mxu0 0
    %418 = vmatpush1.bf16.msra.mxu0 0
    %419 = vmatprep.mubr.bf16.mxu0 0
    %420 = vmatmul.mubr.bf16.gmra.mrb[0].mxu0 %v373
    %v421 = vpop.f32.mrb[0].mxu0
    %v422 = vadd.f32 %v322, %v421
    %v423 = vpop.f32.mrb[0].mxu0
    %v424 = vpop.f32.mrb[0].mxu0
    %v425 = vadd.f32 %v327, %v424
    %v426 = vpop.f32.mrb[0].mxu0
    %427 = vmatprep.mubr.bf16.mxu0 0
    %428 = vmatmul.mubr.bf16.gmra.mrb[0].mxu0 %v376
    %v429 = vpop.f32.mrb[0].mxu0
    %v430 = vadd.f32 %v332, %v429
    %v431 = vpop.f32.mrb[0].mxu0
    %v432 = vpop.f32.mrb[0].mxu0
    %v433 = vadd.f32 %v337, %v432
    %v434 = vpop.f32.mrb[0].mxu0
    %435 = vmatprep.mubr.bf16.mxu0 0
    %436 = vmatmul.mubr.bf16.gmra.mrb[0].mxu0 %v379
    %v437 = vpop.f32.mrb[0].mxu0
    %v438 = vadd.f32 %v342, %v437
    %v439 = vpop.f32.mrb[0].mxu0
    %v440 = vpop.f32.mrb[0].mxu0
    %v441 = vadd.f32 %v347, %v440
    %v442 = vpop.f32.mrb[0].mxu0
    %443 = vmatprep.mubr.bf16.mxu0 0
    %444 = vmatmul.mubr.bf16.gmra.mrb[0].mxu0 %v382
    %v445 = vpop.f32.mrb[0].mxu0
    %v446 = vadd.f32 %v352, %v445
    %v447 = vpop.f32.mrb[0].mxu0
    %v448 = vpop.f32.mrb[0].mxu0
    %v449 = vpop.f32.mrb[0].mxu0
    %450 = vdwg.mxu0
    %v451 = vtanh.pop %v422
    %v452 = vtanh.pop %v425
    %v453 = vtanh.pop %v430
    %v454 = vtanh.pop %v433
    %v455 = vtanh.pop %v438
    %v456 = vtanh.pop %v441
    %v457 = vtanh.pop %v446
    %s458 = scalar_lea.vmem %s3, 56
    %v459 = vld [vmem:[%s458] sm:$0xf]
    %v460 = vld [vmem:[%s458 + $0x4] sm:$0xf]
    %v461 = vld [vmem:[%s458 + $0x8] sm:$0xf]
    %v462 = vld [vmem:[%s458 + $0xc] sm:$0xf]
    %v463 = vld [vmem:[%s458 + $0x10] sm:$0xf]
    %v464 = vld [vmem:[%s458 + $0x14] sm:$0xf]
    %v465 = vld [vmem:[%s458 + $0x18] sm:$0x1]
    %v466 = vpack.c.bf16 %v452, %v451
    %v467 = vpack.c.bf16 %v454, %v453
    %v468 = vpack.c.bf16 %v456, %v455
    %v469 = vpack.c.bf16 %v457, %v457
    %s470 = scalar_lea.vmem %s2, 168
    %v471 = vld [vmem:[%s470] sm:$0xff]
    %v472 = vld [vmem:[%s470 + $0x8] sm:$0xff]
    %v473 = vld [vmem:[%s470 + $0x10] sm:$0xff]
    %v474 = vld [vmem:[%s470 + $0x18] sm:$0xff]
    %v475 = vld [vmem:[%s470 + $0x20] sm:$0xff]
    %v476 = vld [vmem:[%s470 + $0x28] sm:$0xff]
    %v477 = vld [vmem:[%s470 + $0x30] sm:$0x3]
    %479 = vset.pattern.permute.xlu0 0
    %480 = vperm.xlu0 %479, %v471
    %v481 = vpop.permute.xlu0 %480
    %484 = vset.pattern.permute.xlu0 0
    %485 = vperm.xlu0 %484, %v472
    %v486 = vpop.permute.xlu0 %485
    %489 = vset.pattern.permute.xlu0 0
    %490 = vperm.xlu0 %489, %v473
    %v491 = vpop.permute.xlu0 %490
    %494 = vset.pattern.permute.xlu0 0
    %495 = vperm.xlu0 %494, %v474
    %v496 = vpop.permute.xlu0 %495
    %499 = vset.pattern.permute.xlu0 0
    %500 = vperm.xlu0 %499, %v475
    %v501 = vpop.permute.xlu0 %500
    %504 = vset.pattern.permute.xlu0 0
    %505 = vperm.xlu0 %504, %v476
    %v506 = vpop.permute.xlu0 %505
    %509 = vset.pattern.permute.xlu0 0
    %510 = vperm.xlu0 %509, %v477
    %v511 = vpop.permute.xlu0 %510
    %v520 = vunpack.c.l.b16 %v459
    %v521 = vunpack.c.l.b16 %v460
    %v522 = vunpack.c.l.b16 %v461
    %v523 = vunpack.c.l.b16 %v462
    %v524 = vunpack.c.l.b16 %v463
    %v525 = vunpack.c.l.b16 %v464
    %v526 = vunpack.c.l.b16 %v465
    %v527 = vpack.c.b16 %v521, %v520
    %v528 = vpack.c.b16 %v523, %v522
    %v529 = vpack.c.b16 %v525, %v524
    %v530 = vpack.c.b16 %v526, %v526
    %v532 = vsel %vm211, %v527, 0
    %v535 = vsel %vm211, %v528, 0
    %v538 = vsel %vm211, %v529, 0
    %v541 = vsel %vm211, %v530, 0
    %v544 = vsel %vm224, %v469, 0
    %546 = vmatprep.subr.bf16.mxu0 0
    %547 = vmatpush1.bf16.msra.mxu0 %v466
    %548 = vmatprep.subr.bf16.mxu0 0
    %549 = vmatpush1.bf16.msra.mxu0 %v467
    %550 = vmatprep.subr.bf16.mxu0 0
    %551 = vmatpush1.bf16.msra.mxu0 %v468
    %552 = vmatprep.subr.bf16.mxu0 0
    %553 = vmatpush1.bf16.msra.mxu0 %v544
    %554 = vmatprep.subr.bf16.mxu0 0
    %555 = vmatpush1.bf16.msra.mxu0 0
    %556 = vmatprep.subr.bf16.mxu0 0
    %557 = vmatpush1.bf16.msra.mxu0 0
    %558 = vmatprep.subr.bf16.mxu0 0
    %559 = vmatpush1.bf16.msra.mxu0 0
    %560 = vmatprep.subr.bf16.mxu0 0
    %561 = vmatpush1.bf16.msra.mxu0 0
    %562 = vmatprep.subr.bf16.mxu0 0
    %563 = vmatpush1.bf16.msra.mxu0 0
    %564 = vmatprep.subr.bf16.mxu0 0
    %565 = vmatpush1.bf16.msra.mxu0 0
    %566 = vmatprep.subr.bf16.mxu0 0
    %567 = vmatpush1.bf16.msra.mxu0 0
    %568 = vmatprep.subr.bf16.mxu0 0
    %569 = vmatpush1.bf16.msra.mxu0 0
    %570 = vmatprep.subr.bf16.mxu0 0
    %571 = vmatpush1.bf16.msra.mxu0 0
    %572 = vmatprep.subr.bf16.mxu0 0
    %573 = vmatpush1.bf16.msra.mxu0 0
    %574 = vmatprep.subr.bf16.mxu0 0
    %575 = vmatpush1.bf16.msra.mxu0 0
    %576 = vmatprep.subr.bf16.mxu0 0
    %577 = vmatpush1.bf16.msra.mxu0 0
    %578 = vmatprep.mubr.bf16.mxu0 0
    %579 = vmatmul.mubr.bf16.gmra.mrb[0].mxu0 %v532
    %v580 = vpop.f32.mrb[0].mxu0
    %v581 = vadd.f32 %v481, %v580
    %v582 = vpop.f32.mrb[0].mxu0
    %v583 = vpop.f32.mrb[0].mxu0
    %v584 = vadd.f32 %v486, %v583
    %v585 = vpop.f32.mrb[0].mxu0
    %586 = vmatprep.mubr.bf16.mxu0 0
    %587 = vmatmul.mubr.bf16.gmra.mrb[0].mxu0 %v535
    %v588 = vpop.f32.mrb[0].mxu0
    %v589 = vadd.f32 %v491, %v588
    %v590 = vpop.f32.mrb[0].mxu0
    %v591 = vpop.f32.mrb[0].mxu0
    %v592 = vadd.f32 %v496, %v591
    %v593 = vpop.f32.mrb[0].mxu0
    %594 = vmatprep.mubr.bf16.mxu0 0
    %595 = vmatmul.mubr.bf16.gmra.mrb[0].mxu0 %v538
    %v596 = vpop.f32.mrb[0].mxu0
    %v597 = vadd.f32 %v501, %v596
    %v598 = vpop.f32.mrb[0].mxu0
    %v599 = vpop.f32.mrb[0].mxu0
    %v600 = vadd.f32 %v506, %v599
    %v601 = vpop.f32.mrb[0].mxu0
    %602 = vmatprep.mubr.bf16.mxu0 0
    %603 = vmatmul.mubr.bf16.gmra.mrb[0].mxu0 %v541
    %v604 = vpop.f32.mrb[0].mxu0
    %v605 = vadd.f32 %v511, %v604
    %v606 = vpop.f32.mrb[0].mxu0
    %v607 = vpop.f32.mrb[0].mxu0
    %v608 = vpop.f32.mrb[0].mxu0
    %609 = vdwg.mxu0
    %v610 = vtanh.pop %v581
    %v611 = vtanh.pop %v584
    %v612 = vtanh.pop %v589
    %v613 = vtanh.pop %v592
    %v614 = vtanh.pop %v597
    %v615 = vtanh.pop %v600
    %v616 = vtanh.pop %v605
    %v617 = vld [vmem:[%s4] sm:$0xff]
    %v618 = vld [vmem:[%s4 + $0x8] sm:$0xff]
    %v619 = vld [vmem:[%s4 + $0x10] sm:$0xff]
    %v620 = vld [vmem:[%s4 + $0x18] sm:$0xff]
    %v621 = vld [vmem:[%s4 + $0x20] sm:$0xff]
    %v622 = vld [vmem:[%s4 + $0x28] sm:$0xff]
    %v623 = vld [vmem:[%s4 + $0x30] sm:$0x3]
    %625 = vset.pattern.permute.xlu0 0
    %626 = vperm.xlu0 %625, %v617
    %v627 = vpop.permute.xlu0 %626
    %630 = vset.pattern.permute.xlu0 0
    %631 = vperm.xlu0 %630, %v618
    %v632 = vpop.permute.xlu0 %631
    %635 = vset.pattern.permute.xlu0 0
    %636 = vperm.xlu0 %635, %v619
    %v637 = vpop.permute.xlu0 %636
    %640 = vset.pattern.permute.xlu0 0
    %641 = vperm.xlu0 %640, %v620
    %v642 = vpop.permute.xlu0 %641
    %645 = vset.pattern.permute.xlu0 0
    %646 = vperm.xlu0 %645, %v621
    %v647 = vpop.permute.xlu0 %646
    %650 = vset.pattern.permute.xlu0 0
    %651 = vperm.xlu0 %650, %v622
    %v652 = vpop.permute.xlu0 %651
    %655 = vset.pattern.permute.xlu0 0
    %656 = vperm.xlu0 %655, %v623
    %v657 = vpop.permute.xlu0 %656
    %v659 = vmul.f32 %v627, %v610
    %v660 = vmul.f32 %v632, %v611
    %v661 = vmul.f32 %v637, %v612
    %v662 = vmul.f32 %v642, %v613
    %v663 = vmul.f32 %v647, %v614
    %v664 = vmul.f32 %v652, %v615
    %v665 = vmul.f32 %v657, %v616
    %v666 = vadd.f32 %v659, %v660
    %v667 = vadd.f32 %v666, %v661
    %v668 = vadd.f32 %v667, %v662
    %v669 = vadd.f32 %v668, %v663
    %v670 = vadd.f32 %v669, %v664
    %vm671 = vcmask 1041408
    %v672 = vsel %vm671, %v665, 0.0
    %v673 = vadd.f32 %v670, %v672
    %v674 = vrot.slane %v673, 4
    %v675 = vadd.f32 %v673, %v674
    %v676 = vrot.slane %v675, 2
    %v677 = vadd.f32 %v675, %v676
    %v678 = vrot.slane %v677, 1
    %v679 = vadd.f32 %v677, %v678
    %v680 = vld [vmem:[#allocation2] sm:$0x1]
    %682 = vset.pattern.permute.xlu0 0
    %683 = vperm.xlu0 %682, %v680
    %v684 = vpop.permute.xlu0 %683
    %v686 = vlaneseq
    %v687 = vshrl.u32 %v686, 7
    %v688 = vsub.s32 0, %v687
    %v689 = vrot.slane %v684, %v688
    %v690 = vadd.f32 %v679, %v689
    %691 = vst [vmem:[#allocation3] sm:$0x1] %v690
    // Predicated region
    $region26: #{tpu_custom_call.1} parent=1 // pred_check
      _
    $region27: #{tpu_custom_call.1} parent=1 // pred_check_branch
      %693 = sbr.rel (0) target = $region29
    $region28: #{tpu_custom_call.1} parent=1 // pred_region
      %s695 = ssub.s32 16, 16
      %696 = vsyncadd [#allocation4], %s695
      %s698 = sshll.u32 [#allocation3], 4
      %s699 = int_to_ptr.vmem [resolvable:$true] %s698
      %701 = dma.vmem_to_hbm [thread:$0]  %s699, 16, %s6, [#allocation4]
    $region29: #{tpu_custom_call.1} parent=1 // pred_fallthru
      _
    // Predicated region
    $region30: #{tpu_custom_call.1} parent=1 // pred_check
      _
    $region31: #{tpu_custom_call.1} parent=1 // pred_check_branch
      %703 = sbr.rel (0) target = $region33
    $region32: #{tpu_custom_call.1} parent=1 // pred_region
      %704 = dma.done [#allocation4], 16
    $region33: #{tpu_custom_call.1} parent=1 // pred_fallthru
      _
    %705 = vsyncpa [#allocation4], 1

</llo_original>
